<compile_context>
chip_gen: v5e
topology: v5e:2x2
jax: 0.10.0
libtpu: 0.0.40
codegen_flags: <defaults>
</compile_context>

<pallas_src>
import jax
import jax.numpy as jnp
from jax.experimental import pallas as pl
from jax.experimental.pallas import tpu as pltpu


def _round_up(x, m):
    return ((x + m - 1) // m) * m


def xtoy_kernel(x_ref, mask_ref, w_ref, b_ref, out_ref):
    # x_ref:    (B_tile, n, dx)  native dtype (f32 / bf16) - upcast in VMEM
    # mask_ref: (B_tile, n)      f32 {0,1}, unexpanded
    # w_ref:    (4*dx, dy)       f32 (pre-transposed Linear weight)
    # b_ref:    (1, dy)          f32
    # out_ref:  (B_tile, dy)     f32
    Bt, n, dx = x_ref.shape

    # Stream the node axis in static chunks: one fused pass over X, small temporaries.
    ch = n if n <= 128 else 128

    s1 = jnp.zeros((Bt, dx), jnp.float32)         # sum_n X          (unmasked, like torch)
    sm1 = jnp.zeros((Bt, dx), jnp.float32)        # sum_n mask*X
    sm2 = jnp.zeros((Bt, dx), jnp.float32)        # sum_n mask*X^2
    mi = jnp.full((Bt, dx), jnp.inf, jnp.float32)
    ma = jnp.full((Bt, dx), -jnp.inf, jnp.float32)
    denom = jnp.zeros((Bt, 1), jnp.float32)

    for lo in range(0, n, ch):                    # static trip count, static slices
        sz = min(ch, n - lo)
        xc = x_ref[:, lo:lo + sz, :].astype(jnp.float32)   # (Bt, sz, dx)
        mc2 = mask_ref[:, lo:lo + sz]                      # (Bt, sz)
        mc = mc2[:, :, None]                               # (Bt, sz, 1) -> broadcasts over dx
        imc = 1.0 - mc
        xm = xc * mc
        s1 = s1 + jnp.sum(xc, axis=1)
        sm1 = sm1 + jnp.sum(xm, axis=1)
        sm2 = sm2 + jnp.sum(xm * xc, axis=1)
        mi = jnp.minimum(mi, jnp.min(xc + 100000.0 * imc, axis=1))
        ma = jnp.maximum(ma, jnp.max(xc - 100000.0 * imc, axis=1))
        denom = denom + jnp.sum(mc2, axis=1, keepdims=True)

    inv = 1.0 / denom                                       # (Bt, 1)
    m = s1 * inv                                            # mean (unmasked numerator)
    # masked variance via sum-of-squares identity:
    #   sum(mask*(X-m)^2) = sm2 - 2*m*sm1 + m^2*denom   (exact algebraically, f32 accumulation)
    std = (sm2 - 2.0 * m * sm1 + (m * m) * denom) * inv

    # Four accumulated MXU matmuls on static W slices (no lane-axis concat / relayout).
    w = w_ref[...]
    out = jnp.dot(m, w[0:dx, :], preferred_element_type=jnp.float32)
    out = out + jnp.dot(mi, w[dx:2 * dx, :], preferred_element_type=jnp.float32)
    out = out + jnp.dot(ma, w[2 * dx:3 * dx, :], preferred_element_type=jnp.float32)
    out = out + jnp.dot(std, w[3 * dx:4 * dx, :], preferred_element_type=jnp.float32)
    out_ref[...] = out + b_ref[...]


def xtoy_forward(X, x_mask_bool, W_t, b, *, target_steps=8, max_b_tile=256,
                 input_vmem_budget=12 * 1024 * 1024):
    """X: (bs, n, dx) f32/bf16; x_mask_bool: (bs, n, 1) bool; W_t: (4*dx, dy); b: (dy,)."""
    bs, n, dx = X.shape
    dy = W_t.shape[1]

    # Tiny glue only: unexpanded f32 mask, f32 params. X is NOT touched (no pad / no cast).
    mask2d = x_mask_bool.reshape(bs, n).astype(jnp.float32)
    W_t = W_t.astype(jnp.float32)
    b2d = b.reshape(1, dy).astype(jnp.float32)

    itemsize = jnp.dtype(X.dtype).itemsize
    sublane = max(8, 32 // max(1, itemsize))                 # 8 (f32) / 16 (bf16)

    # ---- VMEM-aware tile sizing using *padded* tile shapes, double-buffered ----
    x_row = itemsize * _round_up(n, sublane) * _round_up(dx, 128)   # bytes per batch row of X tile
    mask_row = 4 * _round_up(n, 128)                                 # (B_tile, n) f32 block, per row
    per_row = 2 * (x_row + mask_row)                                 # x2 = double buffering
    rows_fit = max(8, ((input_vmem_budget // per_row) // 8) * 8)
    b_cap = int(min(max_b_tile, rows_fit))

    if bs <= 8:
        B_tile = bs                                # single exact block, no boundary padding
    else:
        # Aim for several grid steps (even when possible -> both v7x TensorCores busy).
        steps = max(pl.cdiv(bs, b_cap), min(target_steps, pl.cdiv(bs, 8)))
        if steps > 1 and steps % 2 == 1:
            steps += 1
        B_tile = max(8, min(b_cap, _round_up(pl.cdiv(bs, steps), 8)))
    grid = (pl.cdiv(bs, B_tile),)                  # ragged last block OK: OOB writes are masked

    # Explicit scoped-VMEM limit: enough for our tiles + working set, <= 48 MiB (v7x-safe).
    w_bytes = 4 * _round_up(4 * dx, 8) * _round_up(dy, 128)
    out_bytes = 2 * 4 * _round_up(B_tile, 8) * _round_up(dy, 128)
    ws_bytes = 4 * B_tile * _round_up(min(n, 128), 8) * _round_up(dx, 128) \
        + 8 * 4 * B_tile * _round_up(dx, 128)
    est = B_tile * per_row + w_bytes + out_bytes + ws_bytes
    vmem_limit = int(min(48 * 1024 * 1024, max(24 * 1024 * 1024, 2 * est)))

    out = pl.pallas_call(
        xtoy_kernel,
        out_shape=jax.ShapeDtypeStruct((bs, dy), jnp.float32),
        grid=grid,
        in_specs=[
            pl.BlockSpec((B_tile, n, dx), lambda i: (i, 0, 0)),   # X tile (native dtype)
            pl.BlockSpec((B_tile, n), lambda i: (i, 0)),          # unexpanded f32 mask tile
            pl.BlockSpec((4 * dx, dy), lambda i: (0, 0)),         # W (resident)
            pl.BlockSpec((1, dy), lambda i: (0, 0)),              # bias (resident)
        ],
        out_specs=pl.BlockSpec((B_tile, dy), lambda i: (i, 0)),
        compiler_params=pltpu.CompilerParams(
            dimension_semantics=("parallel",),
            vmem_limit_bytes=vmem_limit,
        ),
    )(X, mask2d, W_t, b2d)
    return out


def xtoy_reference(X, x_mask_bool, W_t, b):
    """Pure-JAX reference mirroring the PyTorch forward (two-pass std)."""
    bs, n, dx = X.shape
    mask = jnp.broadcast_to(x_mask_bool, (bs, n, dx)).astype(jnp.float32)
    imask = 1.0 - mask
    denom = jnp.sum(mask, axis=1)
    m = jnp.sum(X.astype(jnp.float32), axis=1) / denom
    mi = jnp.min(X + 100000.0 * imask, axis=1)
    ma = jnp.max(X - 100000.0 * imask, axis=1)
    std = jnp.sum((X - m[:, None, :]) ** 2 * mask, axis=1) / denom
    z = jnp.concatenate([m, mi, ma, std], axis=-1)
    return z @ W_t + b[None, :]


if __name__ == "__main__":
    bs, n, dx, dy = 2, 8, 8, 16

    key = jax.random.PRNGKey(0)
    kx, kmask, kw, kb = jax.random.split(key, 4)

    X = jax.random.normal(kx, (bs, n, dx), dtype=jnp.float32)

    # Random boolean node mask (bs, n, 1); force node 0 valid so denominators are nonzero.
    mask = jax.random.bernoulli(kmask, p=0.7, shape=(bs, n, 1))
    mask = mask.at[:, 0, :].set(True)

    # Deterministic Linear(4*dx, dy) parameters (Kaiming-uniform-ish bound like nn.Linear).
    bound = 1.0 / jnp.sqrt(4.0 * dx)
    W = jax.random.uniform(kw, (dy, 4 * dx), minval=-bound, maxval=bound,
                           dtype=jnp.float32)          # PyTorch layout (out, in)
    b = jax.random.uniform(kb, (dy,), minval=-bound, maxval=bound, dtype=jnp.float32)
    W_t = W.T                                          # (4*dx, dy) for z @ W_t

    out = jax.block_until_ready(xtoy_forward(X, mask, W_t, b))

    ref = xtoy_reference(X, mask, W_t, b)
    assert out.shape == (bs, dy)
    assert jnp.allclose(out, ref, atol=1e-4, rtol=1e-4), "mismatch vs reference"

    print("KERNEL_OK")
</pallas_src>

<mosaic_0001>
module attributes {stable_mosaic.version = 11 : i64} {
  func.func @xtoy_kernel(%arg0: i32, %arg1: memref<2x8x8xf32, #tpu.memory_space<vmem>>, %arg2: memref<2x8xf32, #tpu.memory_space<vmem>>, %arg3: memref<32x16xf32, #tpu.memory_space<vmem>>, %arg4: memref<1x16xf32, #tpu.memory_space<vmem>>, %arg5: memref<2x16xf32, #tpu.memory_space<vmem>>) attributes {dimension_semantics = [#tpu.dimension_semantics<parallel>], iteration_bounds = array<i64: 1>, scalar_prefetch = 0 : i64, scratch_operands = 0 : i64, tpu.core_type = #tpu.core_type<tc>, window_params = [{transform_indices = @transform_0, window_bounds = array<i64: 2, 8, 8>}, {transform_indices = @transform_1, window_bounds = array<i64: 2, 8>}, {pipeline_mode = #tpu.pipeline_mode<synchronous>, transform_indices = @transform_2, window_bounds = array<i64: 32, 16>}, {pipeline_mode = #tpu.pipeline_mode<synchronous>, transform_indices = @transform_3, window_bounds = array<i64: 1, 16>}, {transform_indices = @transform_4, window_bounds = array<i64: 2, 16>}]} {
    %cst = arith.constant 0.000000e+00 : f32
    %0 = vector.broadcast %cst : f32 to vector<2x8xf32>
    %cst_0 = arith.constant 0.000000e+00 : f32
    %1 = vector.broadcast %cst_0 : f32 to vector<2x8xf32>
    %cst_1 = arith.constant 0.000000e+00 : f32
    %2 = vector.broadcast %cst_1 : f32 to vector<2x8xf32>
    %cst_2 = arith.constant 0x7F800000 : f32
    %3 = vector.broadcast %cst_2 : f32 to vector<2x8xf32>
    %cst_3 = arith.constant 0xFF800000 : f32
    %4 = vector.broadcast %cst_3 : f32 to vector<2x8xf32>
    %cst_4 = arith.constant 0.000000e+00 : f32
    %5 = vector.broadcast %cst_4 : f32 to vector<2x1xf32>
    %c0 = arith.constant 0 : index
    %c0_5 = arith.constant 0 : index
    %c0_6 = arith.constant 0 : index
    %6 = vector.load %arg1[%c0, %c0_5, %c0_6] : memref<2x8x8xf32, #tpu.memory_space<vmem>>, vector<2x8x8xf32>
    %c0_7 = arith.constant 0 : index
    %c0_8 = arith.constant 0 : index
    %7 = vector.load %arg2[%c0_7, %c0_8] : memref<2x8xf32, #tpu.memory_space<vmem>>, vector<2x8xf32>
    %8 = vector.shape_cast %7 : vector<2x8xf32> to vector<2x8x1xf32>
    %cst_9 = arith.constant 1.000000e+00 : f32
    %9 = vector.broadcast %cst_9 : f32 to vector<2x8x1xf32>
    %10 = arith.subf %9, %8 : vector<2x8x1xf32>
    %11 = vector.broadcast %8 : vector<2x8x1xf32> to vector<2x8x8xf32>
    %12 = arith.mulf %6, %11 : vector<2x8x8xf32>
    %cst_10 = arith.constant dense<0.000000e+00> : vector<2x8xf32>
    %13 = vector.multi_reduction <add>, %6, %cst_10 [1] : vector<2x8x8xf32> to vector<2x8xf32>
    %14 = arith.addf %0, %13 : vector<2x8xf32>
    %cst_11 = arith.constant dense<0.000000e+00> : vector<2x8xf32>
    %15 = vector.multi_reduction <add>, %12, %cst_11 [1] : vector<2x8x8xf32> to vector<2x8xf32>
    %16 = arith.addf %1, %15 : vector<2x8xf32>
    %17 = arith.mulf %12, %6 : vector<2x8x8xf32>
    %cst_12 = arith.constant dense<0.000000e+00> : vector<2x8xf32>
    %18 = vector.multi_reduction <add>, %17, %cst_12 [1] : vector<2x8x8xf32> to vector<2x8xf32>
    %19 = arith.addf %2, %18 : vector<2x8xf32>
    %cst_13 = arith.constant 1.000000e+05 : f32
    %20 = vector.broadcast %cst_13 : f32 to vector<2x8x1xf32>
    %21 = arith.mulf %20, %10 : vector<2x8x1xf32>
    %22 = vector.broadcast %21 : vector<2x8x1xf32> to vector<2x8x8xf32>
    %23 = arith.addf %6, %22 : vector<2x8x8xf32>
    %cst_14 = arith.constant dense<0x7F800000> : vector<2x8xf32>
    %24 = vector.multi_reduction <minimumf>, %23, %cst_14 [1] : vector<2x8x8xf32> to vector<2x8xf32>
    %25 = arith.minimumf %3, %24 : vector<2x8xf32>
    %cst_15 = arith.constant 1.000000e+05 : f32
    %26 = vector.broadcast %cst_15 : f32 to vector<2x8x1xf32>
    %27 = arith.mulf %26, %10 : vector<2x8x1xf32>
    %28 = vector.broadcast %27 : vector<2x8x1xf32> to vector<2x8x8xf32>
    %29 = arith.subf %6, %28 : vector<2x8x8xf32>
    %cst_16 = arith.constant dense<0xFF800000> : vector<2x8xf32>
    %30 = vector.multi_reduction <maximumf>, %29, %cst_16 [1] : vector<2x8x8xf32> to vector<2x8xf32>
    %31 = arith.maximumf %4, %30 : vector<2x8xf32>
    %cst_17 = arith.constant dense<0.000000e+00> : vector<2xf32>
    %32 = vector.multi_reduction <add>, %7, %cst_17 [1] : vector<2x8xf32> to vector<2xf32>
    %33 = vector.shape_cast %32 : vector<2xf32> to vector<2x1xf32>
    %34 = arith.addf %5, %33 : vector<2x1xf32>
    %cst_18 = arith.constant 1.000000e+00 : f32
    %35 = vector.broadcast %cst_18 : f32 to vector<2x1xf32>
    %36 = arith.divf %35, %34 : vector<2x1xf32>
    %37 = vector.broadcast %36 : vector<2x1xf32> to vector<2x8xf32>
    %38 = arith.mulf %14, %37 : vector<2x8xf32>
    %cst_19 = arith.constant 2.000000e+00 : f32
    %39 = vector.broadcast %cst_19 : f32 to vector<2x8xf32>
    %40 = arith.mulf %39, %38 : vector<2x8xf32>
    %41 = arith.mulf %40, %16 : vector<2x8xf32>
    %42 = arith.subf %19, %41 : vector<2x8xf32>
    %43 = arith.mulf %38, %38 : vector<2x8xf32>
    %44 = vector.broadcast %34 : vector<2x1xf32> to vector<2x8xf32>
    %45 = arith.mulf %43, %44 : vector<2x8xf32>
    %46 = arith.addf %42, %45 : vector<2x8xf32>
    %47 = vector.broadcast %36 : vector<2x1xf32> to vector<2x8xf32>
    %48 = arith.mulf %46, %47 : vector<2x8xf32>
    %c0_20 = arith.constant 0 : index
    %c0_21 = arith.constant 0 : index
    %49 = vector.load %arg3[%c0_20, %c0_21] : memref<32x16xf32, #tpu.memory_space<vmem>>, vector<32x16xf32>
    %50 = vector.extract_strided_slice %49 {offsets = [0, 0], sizes = [8, 16], strides = [1, 1]} : vector<32x16xf32> to vector<8x16xf32>
    %cst_22 = arith.constant dense<0.000000e+00> : vector<2x16xf32>
    %51 = tpu.matmul %38, %50, %cst_22 {dimension_numbers = #tpu.dot_dimension_numbers<[1], [0], [0], [1], [0, 0, 1, 1], [], []>} : vector<2x8xf32>, vector<8x16xf32>, vector<2x16xf32> -> vector<2x16xf32>
    %52 = vector.extract_strided_slice %49 {offsets = [8, 0], sizes = [8, 16], strides = [1, 1]} : vector<32x16xf32> to vector<8x16xf32>
    %cst_23 = arith.constant dense<0.000000e+00> : vector<2x16xf32>
    %53 = tpu.matmul %25, %52, %cst_23 {dimension_numbers = #tpu.dot_dimension_numbers<[1], [0], [0], [1], [0, 0, 1, 1], [], []>} : vector<2x8xf32>, vector<8x16xf32>, vector<2x16xf32> -> vector<2x16xf32>
    %54 = arith.addf %51, %53 : vector<2x16xf32>
    %55 = vector.extract_strided_slice %49 {offsets = [16, 0], sizes = [8, 16], strides = [1, 1]} : vector<32x16xf32> to vector<8x16xf32>
    %cst_24 = arith.constant dense<0.000000e+00> : vector<2x16xf32>
    %56 = tpu.matmul %31, %55, %cst_24 {dimension_numbers = #tpu.dot_dimension_numbers<[1], [0], [0], [1], [0, 0, 1, 1], [], []>} : vector<2x8xf32>, vector<8x16xf32>, vector<2x16xf32> -> vector<2x16xf32>
    %57 = arith.addf %54, %56 : vector<2x16xf32>
    %58 = vector.extract_strided_slice %49 {offsets = [24, 0], sizes = [8, 16], strides = [1, 1]} : vector<32x16xf32> to vector<8x16xf32>
    %cst_25 = arith.constant dense<0.000000e+00> : vector<2x16xf32>
    %59 = tpu.matmul %48, %58, %cst_25 {dimension_numbers = #tpu.dot_dimension_numbers<[1], [0], [0], [1], [0, 0, 1, 1], [], []>} : vector<2x8xf32>, vector<8x16xf32>, vector<2x16xf32> -> vector<2x16xf32>
    %60 = arith.addf %57, %59 : vector<2x16xf32>
    %c0_26 = arith.constant 0 : index
    %c0_27 = arith.constant 0 : index
    %61 = vector.load %arg4[%c0_26, %c0_27] : memref<1x16xf32, #tpu.memory_space<vmem>>, vector<1x16xf32>
    %62 = vector.broadcast %61 : vector<1x16xf32> to vector<2x16xf32>
    %63 = arith.addf %60, %62 : vector<2x16xf32>
    %c0_28 = arith.constant 0 : index
    %c0_29 = arith.constant 0 : index
    %64 = vector.load %arg5[%c0_28, %c0_29] : memref<2x16xf32, #tpu.memory_space<vmem>>, vector<2x16xf32>
    tpu.vector_store %arg5[%c0_28, %c0_29], %63 {strides = array<i32>} : memref<2x16xf32, #tpu.memory_space<vmem>>, vector<2x16xf32>,
    return
  }
  func.func @transform_0(%arg0: i32) -> (i32, i32, i32) {
    %c0_i32 = arith.constant 0 : i32
    %c0_i32_0 = arith.constant 0 : i32
    %c0_i32_1 = arith.constant 0 : i32
    return %arg0, %c0_i32, %c0_i32_0 : i32, i32, i32
  }
  func.func @transform_1(%arg0: i32) -> (i32, i32) {
    %c0_i32 = arith.constant 0 : i32
    %c0_i32_0 = arith.constant 0 : i32
    return %arg0, %c0_i32 : i32, i32
  }
  func.func @transform_2(%arg0: i32) -> (i32, i32) {
    %c0_i32 = arith.constant 0 : i32
    %c0_i32_0 = arith.constant 0 : i32
    %c0_i32_1 = arith.constant 0 : i32
    return %c0_i32, %c0_i32_0 : i32, i32
  }
  func.func @transform_3(%arg0: i32) -> (i32, i32) {
    %c0_i32 = arith.constant 0 : i32
    %c0_i32_0 = arith.constant 0 : i32
    %c0_i32_1 = arith.constant 0 : i32
    return %c0_i32, %c0_i32_0 : i32, i32
  }
  func.func @transform_4(%arg0: i32) -> (i32, i32) {
    %c0_i32 = arith.constant 0 : i32
    %c0_i32_0 = arith.constant 0 : i32
    return %arg0, %c0_i32 : i32, i32
  }
}

</mosaic_0001>

<llo_original>
// kernel: tpu_custom_call.1
$region0: #{tpu_custom_call.1}
  #allocation0 [shape = 'u32[]', space=smem, size = 0x4, offset = 0x4, fixed_abs, tag = 'smem constant byte address 0x4 - core index']
  #allocation1 [shape = 'u32[72,128]{1,0:T(1,128)}', space=vmem, size = 0x9000, scoped, tag = 'internal scratch']
  %s0 = inlined_call_operand.vmem [shape: f32[2,8,8], index: 0, kind: input, shape index: {}]
  %s1 = inlined_call_operand.vmem [shape: f32[2,8], index: 1, kind: input, shape index: {}]
  %s2 = inlined_call_operand.vmem [shape: f32[32,16], index: 2, kind: input, shape index: {}]
  %s3 = inlined_call_operand.vmem [shape: f32[1,16], index: 3, kind: input, shape index: {}]
  %s4 = inlined_call_operand.hbm [shape: f32[2,16], index: 4, kind: output, shape index: {}]
  %s5 = sld [smem:[#allocation0]]
  $region26: #{tpu_custom_call.1} parent=0
    _
  %s7 = ssub.s32 1, %s5
  %s8 = scalar_select 0, %s7, %s5
  $region1: #{tpu_custom_call.1} parent=0
    #allocation2 [shape = 'u8[1024]{0}', space=vmem, size = 0x400, scoped, tag = 'output window, operand 0, single buffered']
    #allocation3 [shape = 's32[1]{0}', space=sflag, size = 0x4, scoped, tag = 'scoped memory for tpu_custom_call.1']
    %9 = vsyncpa [#allocation3], 0
    // Predicated region
    $region2: #{tpu_custom_call.1} parent=1 // pred_check
      _
    $region3: #{tpu_custom_call.1} parent=1 // pred_check_branch
      %11 = sbr.rel (0) target = $region5
    $region4: #{tpu_custom_call.1} parent=1 // pred_region
      _
    $region5: #{tpu_custom_call.1} parent=1 // pred_fallthru
      _
    // Predicated region
    $region6: #{tpu_custom_call.1} parent=1 // pred_check
      _
    $region7: #{tpu_custom_call.1} parent=1 // pred_check_branch
      %13 = sbr.rel (0) target = $region9
    $region8: #{tpu_custom_call.1} parent=1 // pred_region
      _
    $region9: #{tpu_custom_call.1} parent=1 // pred_fallthru
      _
    // Predicated region
    $region10: #{tpu_custom_call.1} parent=1 // pred_check
      _
    $region11: #{tpu_custom_call.1} parent=1 // pred_check_branch
      %15 = sbr.rel (0) target = $region13
    $region12: #{tpu_custom_call.1} parent=1 // pred_region
      _
    $region13: #{tpu_custom_call.1} parent=1 // pred_fallthru
      _
    // Predicated region
    $region14: #{tpu_custom_call.1} parent=1 // pred_check
      _
    $region15: #{tpu_custom_call.1} parent=1 // pred_check_branch
      %17 = sbr.rel (0) target = $region17
    $region16: #{tpu_custom_call.1} parent=1 // pred_region
      _
    $region17: #{tpu_custom_call.1} parent=1 // pred_fallthru
      _
    %v18 = vld [vmem:[%s0] sm:$0xff]
    %v19 = vld [vmem:[%s0 + $0x8] sm:$0xff]
    %v20 = vld [vmem:[%s1] sm:$0x3]
    %v21 = vperm.slane %v20, 0
    %v22 = vlaneseq
    %v23 = vshrl.u32 %v22, 7
    %25 = vset.pattern.permute.xlu0 %v23
    %26 = vperm.xlu0 %25, %v21
    %v27 = vpop.permute.xlu0 %26
    %v28 = vperm.slane %v20, 1
    %v29 = vlaneseq
    %v30 = vshrl.u32 %v29, 7
    %32 = vset.pattern.permute.xlu0 %v30
    %33 = vperm.xlu0 %32, %v28
    %v34 = vpop.permute.xlu0 %33
    %v35 = vsub.f32 1.0, %v27
    %v36 = vsub.f32 1.0, %v34
    %v37 = vmul.f32 %v18, %v27
    %v38 = vmul.f32 %v19, %v34
    %vm39 = vcmask 64512
    %v40 = vsel %vm39, %v18, 0.0
    %v41 = vrot.slane %v40, 4
    %v42 = vadd.f32 %v40, %v41
    %v43 = vrot.slane %v42, 2
    %v44 = vadd.f32 %v42, %v43
    %v45 = vrot.slane %v44, 1
    %v46 = vadd.f32 %v44, %v45
    %v47 = vsel %vm39, %v19, 0.0
    %v48 = vrot.slane %v47, 4
    %v49 = vadd.f32 %v47, %v48
    %v50 = vrot.slane %v49, 2
    %v51 = vadd.f32 %v49, %v50
    %v52 = vrot.slane %v51, 1
    %v53 = vadd.f32 %v51, %v52
    %v54 = vadd.f32 %v46, 0.0
    %v55 = vadd.f32 %v53, 0.0
    %v56 = vsel %vm39, %v37, 0.0
    %v57 = vrot.slane %v56, 4
    %v58 = vadd.f32 %v56, %v57
    %v59 = vrot.slane %v58, 2
    %v60 = vadd.f32 %v58, %v59
    %v61 = vrot.slane %v60, 1
    %v62 = vadd.f32 %v60, %v61
    %v63 = vsel %vm39, %v38, 0.0
    %v64 = vrot.slane %v63, 4
    %v65 = vadd.f32 %v63, %v64
    %v66 = vrot.slane %v65, 2
    %v67 = vadd.f32 %v65, %v66
    %v68 = vrot.slane %v67, 1
    %v69 = vadd.f32 %v67, %v68
    %v70 = vadd.f32 %v62, 0.0
    %v71 = vadd.f32 %v69, 0.0
    %v72 = vmul.f32 %v37, %v18
    %v73 = vmul.f32 %v38, %v19
    %v74 = vsel %vm39, %v72, 0.0
    %v75 = vrot.slane %v74, 4
    %v76 = vadd.f32 %v74, %v75
    %v77 = vrot.slane %v76, 2
    %v78 = vadd.f32 %v76, %v77
    %v79 = vrot.slane %v78, 1
    %v80 = vadd.f32 %v78, %v79
    %v81 = vsel %vm39, %v73, 0.0
    %v82 = vrot.slane %v81, 4
    %v83 = vadd.f32 %v81, %v82
    %v84 = vrot.slane %v83, 2
    %v85 = vadd.f32 %v83, %v84
    %v86 = vrot.slane %v85, 1
    %v87 = vadd.f32 %v85, %v86
    %v88 = vadd.f32 %v80, 0.0
    %v89 = vadd.f32 %v87, 0.0
    %v90 = vmul.f32 %v35, 100000.0
    %v91 = vmul.f32 %v36, 100000.0
    %v92 = vadd.f32 %v18, %v90
    %v93 = vadd.f32 %v19, %v91
    %v94 = vsel %vm39, %v92, inf
    %v95 = vrot.slane %v94, 4
    %v96 = vmin.f32 %v94, %v95
    %v97 = vrot.slane %v96, 2
    %v98 = vmin.f32 %v96, %v97
    %v99 = vrot.slane %v98, 1
    %v100 = vmin.f32 %v98, %v99
    %v101 = vsel %vm39, %v93, inf
    %v102 = vrot.slane %v101, 4
    %v103 = vmin.f32 %v101, %v102
    %v104 = vrot.slane %v103, 2
    %v105 = vmin.f32 %v103, %v104
    %v106 = vrot.slane %v105, 1
    %v107 = vmin.f32 %v105, %v106
    %v108 = vsub.f32 %v18, %v90
    %v109 = vsub.f32 %v19, %v91
    %v110 = vsel %vm39, %v108, -inf
    %v111 = vrot.slane %v110, 4
    %v112 = vmax.f32 %v110, %v111
    %v113 = vrot.slane %v112, 2
    %v114 = vmax.f32 %v112, %v113
    %v115 = vrot.slane %v114, 1
    %v116 = vmax.f32 %v114, %v115
    %v117 = vsel %vm39, %v109, -inf
    %v118 = vrot.slane %v117, 4
    %v119 = vmax.f32 %v117, %v118
    %v120 = vrot.slane %v119, 2
    %v121 = vmax.f32 %v119, %v120
    %v122 = vrot.slane %v121, 1
    %v123 = vmax.f32 %v121, %v122
    %vm124 = vcmask 58368
    %v125 = vsel %vm124, %v20, 0.0
    %126 = vadd.xlane.f32.xlu0 %v125
    %v127 = vpop.xlane.xlu0 %126
    %v128 = vadd.f32 %v127, 0.0
    %v129 = vrcp.pop %v128
    %v130 = vmul.f32 %v128, %v129
    %v131 = vsub.f32 1.0, %v130
    %v132 = vmul.f32 %v129, %v131
    %v133 = vadd.f32 %v129, %v132
    %vm134 = vweird.f32 %v128
    %vm135 = vweird.f32 %v129
    %vm136 = vmor %vm134, %vm135
    %v137 = vsel %vm136, %v129, %v133
    %v138 = vand.u32 2147483647, %v128
    %vm139 = vcmp.eq.f32.partialorder %v138, 8.507059e+37
    %v140 = vand.u32 %v128, 2147483648
    %v141 = vor.u32 1.1754944e-38, %v140
    %v142 = vsel %vm139, %v141, %v137
    %v143 = vmul.f32 1.0, %v142
    %v145 = vrot.slane %v143, 1
    %v148 = vmul.f32 %v54, %v143
    %v149 = vmul.f32 %v55, %v145
    %v150 = vmul.f32 %v148, 2.0
    %v151 = vmul.f32 %v149, 2.0
    %v152 = vmul.f32 %v150, %v70
    %v153 = vmul.f32 %v151, %v71
    %v154 = vsub.f32 %v88, %v152
    %v155 = vsub.f32 %v89, %v153
    %v156 = vmul.f32 %v148, %v148
    %v157 = vmul.f32 %v149, %v149
    %v159 = vrot.slane %v128, 1
    %v162 = vmul.f32 %v156, %v128
    %v163 = vmul.f32 %v157, %v159
    %v164 = vadd.f32 %v154, %v162
    %v165 = vadd.f32 %v155, %v163
    %v166 = vmul.f32 %v164, %v143
    %v167 = vmul.f32 %v165, %v145
    %v168 = vld [vmem:[%s2] sm:$0xff]
    %v169 = vld [vmem:[%s2 + $0x8] sm:$0xff]
    %v170 = vld [vmem:[%s2 + $0x10] sm:$0xff]
    %v171 = vld [vmem:[%s2 + $0x18] sm:$0xff]
    %vm174 = vcmask 1041409
    %v175 = vsel %vm174, %v107, %v100
    %v176 = vsel %vm39, %v175, 0
    %178 = vmatpush.msra.mxu0 0.0
    %179 = vmatpush.msra.mxu0 0.0
    %180 = vmatpush.msra.mxu0 0.0
    %181 = vmatpush.msra.mxu0 0.0
    %182 = vmatpush.msra.mxu0 0.0
    %183 = vmatpush.msra.mxu0 0.0
    %184 = vmatpush.msra.mxu0 0.0
    %185 = vmatpush.msra.mxu0 0.0
    %186 = vmatpush.msra.mxu0 0.0
    %187 = vmatpush.msra.mxu0 0.0
    %188 = vmatpush.msra.mxu0 0.0
    %189 = vmatpush.msra.mxu0 0.0
    %190 = vmatpush.msra.mxu0 0.0
    %191 = vmatpush.msra.mxu0 0.0
    %192 = vmatpush.msra.mxu0 0.0
    %193 = vmatpush.msra.mxu0 %v169
    %194 = vmatmul.f32.gmra.mxu0 %v176
    %v195 = vpop.f32.mrf.mxu0
    %v196 = vadd.f32 0.0, %v195
    %197 = vdwg.mxu0
    %v200 = vrot.slane %v149, 7
    %v201 = vsel %vm174, %v200, %v148
    %v202 = vsel %vm39, %v201, 0
    %204 = vmatpush.msra.mxu0 0.0
    %205 = vmatpush.msra.mxu0 0.0
    %206 = vmatpush.msra.mxu0 0.0
    %207 = vmatpush.msra.mxu0 0.0
    %208 = vmatpush.msra.mxu0 0.0
    %209 = vmatpush.msra.mxu0 0.0
    %210 = vmatpush.msra.mxu0 0.0
    %211 = vmatpush.msra.mxu0 0.0
    %212 = vmatpush.msra.mxu0 0.0
    %213 = vmatpush.msra.mxu0 0.0
    %214 = vmatpush.msra.mxu0 0.0
    %215 = vmatpush.msra.mxu0 0.0
    %216 = vmatpush.msra.mxu0 0.0
    %217 = vmatpush.msra.mxu0 0.0
    %218 = vmatpush.msra.mxu0 0.0
    %219 = vmatpush.msra.mxu0 %v168
    %220 = vmatmul.f32.gmra.mxu0 %v202
    %v221 = vpop.f32.mrf.mxu0
    %v222 = vadd.f32 %v196, %v221
    %223 = vdwg.mxu0
    %v226 = vsel %vm174, %v123, %v116
    %v227 = vsel %vm39, %v226, 0
    %229 = vmatpush.msra.mxu0 0.0
    %230 = vmatpush.msra.mxu0 0.0
    %231 = vmatpush.msra.mxu0 0.0
    %232 = vmatpush.msra.mxu0 0.0
    %233 = vmatpush.msra.mxu0 0.0
    %234 = vmatpush.msra.mxu0 0.0
    %235 = vmatpush.msra.mxu0 0.0
    %236 = vmatpush.msra.mxu0 0.0
    %237 = vmatpush.msra.mxu0 0.0
    %238 = vmatpush.msra.mxu0 0.0
    %239 = vmatpush.msra.mxu0 0.0
    %240 = vmatpush.msra.mxu0 0.0
    %241 = vmatpush.msra.mxu0 0.0
    %242 = vmatpush.msra.mxu0 0.0
    %243 = vmatpush.msra.mxu0 0.0
    %244 = vmatpush.msra.mxu0 %v170
    %245 = vmatmul.f32.gmra.mxu0 %v227
    %v246 = vpop.f32.mrf.mxu0
    %v247 = vadd.f32 0.0, %v246
    %248 = vdwg.mxu0
    %v249 = vadd.f32 %v222, %v247
    %v252 = vrot.slane %v167, 7
    %v253 = vsel %vm174, %v252, %v166
    %v254 = vsel %vm39, %v253, 0
    %256 = vmatpush.msra.mxu0 0.0
    %257 = vmatpush.msra.mxu0 0.0
    %258 = vmatpush.msra.mxu0 0.0
    %259 = vmatpush.msra.mxu0 0.0
    %260 = vmatpush.msra.mxu0 0.0
    %261 = vmatpush.msra.mxu0 0.0
    %262 = vmatpush.msra.mxu0 0.0
    %263 = vmatpush.msra.mxu0 0.0
    %264 = vmatpush.msra.mxu0 0.0
    %265 = vmatpush.msra.mxu0 0.0
    %266 = vmatpush.msra.mxu0 0.0
    %267 = vmatpush.msra.mxu0 0.0
    %268 = vmatpush.msra.mxu0 0.0
    %269 = vmatpush.msra.mxu0 0.0
    %270 = vmatpush.msra.mxu0 0.0
    %271 = vmatpush.msra.mxu0 %v171
    %272 = vmatmul.f32.gmra.mxu0 %v254
    %v273 = vpop.f32.mrf.mxu0
    %v274 = vadd.f32 0.0, %v273
    %275 = vdwg.mxu0
    %v276 = vadd.f32 %v249, %v274
    %v277 = vld [vmem:[%s3] sm:$0x1]
    %v279 = vperm.slane %v277, 0
    %v281 = vadd.f32 %v276, %v279
    %vm282 = vcmask 123904
    %283 = vst.msk [vmem:[#allocation2] sm:$0x3] %vm282, %v281
    // Predicated region
    $region18: #{tpu_custom_call.1} parent=1 // pred_check
      _
    $region19: #{tpu_custom_call.1} parent=1 // pred_check_branch
      %285 = sbr.rel (0) target = $region21
    $region20: #{tpu_custom_call.1} parent=1 // pred_region
      %287 = vsyncadd [#allocation3], 0
      %s289 = sshll.u32 [#allocation2], 4
      %s290 = int_to_ptr.vmem [resolvable:$true] %s289
      %s291 = sshll.u32 %s4, 4
      %s292 = int_to_ptr.hbm [resolvable:$true] %s291
      %294 = dma.vmem_to_hbm [thread:$0]  %s290, 32, %s292, [#allocation3]
    $region21: #{tpu_custom_call.1} parent=1 // pred_fallthru
      _
    // Predicated region
    $region22: #{tpu_custom_call.1} parent=1 // pred_check
      _
    $region23: #{tpu_custom_call.1} parent=1 // pred_check_branch
      %296 = sbr.rel (0) target = $region25
    $region24: #{tpu_custom_call.1} parent=1 // pred_region
      %298 = dma.done [#allocation3], 32
    $region25: #{tpu_custom_call.1} parent=1 // pred_fallthru
      _
    %299 = vsyncpa [#allocation3], 1

</llo_original>
